<compile_context>
chip_gen: v6e
topology: v6e:2x2x1
jax: 0.10.0
libtpu: 0.0.40
codegen_flags: <defaults>
</compile_context>

<pallas_src>
import jax
import jax.numpy as jnp
from jax.experimental import pallas as pl
from jax.experimental.pallas import tpu as pltpu

INPUT_FEATURES = 2
LAYER1_NEURONS = 3
LAYER2_NEURONS = 3
OUTPUT_RESULTS = 1

_LANE = 128  # TPU lane width
_SUBLANE = 8  # f32 sublanes per vreg


def _mlp_kernel(w1_ref, b1_ref, w2_ref, b2_ref, w3_ref, b3_ref, x_ref, o_ref):
    """Weights/biases live in SMEM (scalar reads).  x_ref is a VMEM block of
    shape (INPUT_FEATURES, S, L) -- one dense (S, L) plane per feature -- and
    o_ref is the (S, L) output plane for the single output neuron."""

    # Per-feature dense planes (S, L): full sublane + lane occupancy.
    rows = [x_ref[k] for k in range(INPUT_FEATURES)]

    def dense_tanh(rows_in, w_ref, b_ref, n_out):
        # rows_in: list of (S, L) planes; w_ref is (n_out, n_in) in SMEM.
        n_in = len(rows_in)
        out_rows = []
        for j in range(n_out):
            s = rows_in[0] * w_ref[j, 0]
            for k in range(1, n_in):
                s = s + rows_in[k] * w_ref[j, k]      # VPU FMAs
            out_rows.append(jnp.tanh(s + b_ref[j]))   # EUP tanh, f32
        return out_rows

    h1 = dense_tanh(rows, w1_ref, b1_ref, LAYER1_NEURONS)
    h2 = dense_tanh(h1, w2_ref, b2_ref, LAYER2_NEURONS)
    out = dense_tanh(h2, w3_ref, b3_ref, OUTPUT_RESULTS)

    # Single full-tile, lane-dense, unmasked store.
    o_ref[...] = out[0].astype(o_ref.dtype)


def neural_network_forward(x, params, *, batch_tile=512 * 1024, lane_width=512):
    """x: (B, INPUT_FEATURES) f32.  params: PyTorch-layout w{1,2,3} (out,in),
    b{1,2,3} (out,).  Returns (B, OUTPUT_RESULTS) f32.

    batch_tile: requested batch elements per grid step (rounded to a multiple
    of 8*lane_width).  lane_width: lane extent of each (S, L) plane
    (multiple of 128)."""
    B, F = x.shape
    assert F == INPUT_FEATURES
    assert lane_width % _LANE == 0

    w1, b1 = params["w1"], params["b1"]
    w2, b2 = params["w2"], params["b2"]
    w3, b3 = params["w3"], params["b3"]

    # --- Tile geometry: batch elements laid out as (S, L) planes. ---
    L = lane_width
    unit = _SUBLANE * L                              # one (8, L) f32 plane
    tile_req = max(unit, (batch_tile // unit) * unit)
    b_unit_pad = unit * pl.cdiv(B, unit)             # B rounded to a granule
    tb = min(tile_req, b_unit_pad)                   # batch elems per tile
    b_pad = tb * pl.cdiv(B, tb)
    S = tb // L
    num_tiles = b_pad // tb

    # --- Pack input: (B, F) -> (num_tiles, F, S, L) contiguous per-tile slabs.
    x_pad = jnp.pad(x.astype(jnp.float32), ((0, b_pad - B), (0, 0)))
    x_tiled = x_pad.reshape(num_tiles, S, L, INPUT_FEATURES).transpose(0, 3, 1, 2)

    # Double-buffered input + output working set; raise scoped VMEM if needed.
    vmem_needed = 2 * (INPUT_FEATURES + OUTPUT_RESULTS) * tb * 4
    vmem_limit = int(min(max(32 * 1024 * 1024, vmem_needed + 8 * 1024 * 1024),
                         120 * 1024 * 1024))

    smem = pl.BlockSpec(memory_space=pltpu.MemorySpace.SMEM)

    out_tiled = pl.pallas_call(
        _mlp_kernel,
        out_shape=jax.ShapeDtypeStruct((num_tiles, S, L), jnp.float32),
        grid=(num_tiles,),
        in_specs=[
            smem, smem, smem, smem, smem, smem,      # weights/biases, resident
            pl.BlockSpec((None, INPUT_FEATURES, S, L), lambda i: (i, 0, 0, 0)),
        ],
        out_specs=pl.BlockSpec((None, S, L), lambda i: (i, 0, 0)),
        compiler_params=pltpu.CompilerParams(
            dimension_semantics=("parallel",),
            vmem_limit_bytes=vmem_limit,
        ),
    )(w1, b1, w2, b2, w3, b3, x_tiled)

    # (num_tiles, S, L) is exactly batch order; drop the padded tail.
    return out_tiled.reshape(b_pad)[:B].reshape(B, OUTPUT_RESULTS)


def init_params(key):
    """nn.Linear-style init, kept in PyTorch layout: W (out, in), b (out,)."""
    def linear(key, fan_in, fan_out):
        kw, kb = jax.random.split(key)
        bound = 1.0 / jnp.sqrt(float(fan_in))
        w = jax.random.uniform(kw, (fan_out, fan_in), jnp.float32, -bound, bound)
        b = jax.random.uniform(kb, (fan_out,), jnp.float32, -bound, bound)
        return w, b

    k1, k2, k3 = jax.random.split(key, 3)
    w1, b1 = linear(k1, INPUT_FEATURES, LAYER1_NEURONS)
    w2, b2 = linear(k2, LAYER1_NEURONS, LAYER2_NEURONS)
    w3, b3 = linear(k3, LAYER2_NEURONS, OUTPUT_RESULTS)
    return {"w1": w1, "b1": b1, "w2": w2, "b2": b2, "w3": w3, "b3": b3}


def _reference(x, p):
    hp = jax.lax.Precision.HIGHEST
    h1 = jnp.tanh(jnp.dot(x, p["w1"].T, precision=hp) + p["b1"])
    h2 = jnp.tanh(jnp.dot(h1, p["w2"].T, precision=hp) + p["b2"])
    return jnp.tanh(jnp.dot(h2, p["w3"].T, precision=hp) + p["b3"])


if __name__ == "__main__":
    key = jax.random.PRNGKey(0)
    kx, kp = jax.random.split(key)
    params = init_params(kp)

    # Small smoke test (B=8): single tile, semantics check.
    x_small = jax.random.normal(kx, (8, INPUT_FEATURES), jnp.float32)
    out_small = jax.block_until_ready(neural_network_forward(x_small, params))
    ref_small = _reference(x_small, params)
    assert out_small.shape == (8, OUTPUT_RESULTS)
    assert jnp.allclose(out_small, ref_small, atol=1e-5, rtol=1e-5)

    # Ragged batch exercising a 2-step grid, multi-sublane planes and tail
    # padding (B=3000, tiles of 2048 = (16, 128) planes).
    x_big = jax.random.normal(kx, (3000, INPUT_FEATURES), jnp.float32)
    out_big = jax.block_until_ready(
        neural_network_forward(x_big, params, batch_tile=2048, lane_width=128)
    )
    ref_big = _reference(x_big, params)
    assert out_big.shape == (3000, OUTPUT_RESULTS)
    assert jnp.allclose(out_big, ref_big, atol=1e-5, rtol=1e-5)

    print("KERNEL_OK")
</pallas_src>

<mosaic_0001>
module attributes {stable_mosaic.version = 11 : i64} {
  func.func @_mlp_kernel(%arg0: i32, %arg1: memref<3x2xf32, #tpu.memory_space<smem>>, %arg2: memref<3xf32, #tpu.memory_space<smem>>, %arg3: memref<3x3xf32, #tpu.memory_space<smem>>, %arg4: memref<3xf32, #tpu.memory_space<smem>>, %arg5: memref<1x3xf32, #tpu.memory_space<smem>>, %arg6: memref<1xf32, #tpu.memory_space<smem>>, %arg7: memref<1x2x8x512xf32, #tpu.memory_space<vmem>>, %arg8: memref<1x8x512xf32, #tpu.memory_space<vmem>>) attributes {dimension_semantics = [#tpu.dimension_semantics<parallel>], iteration_bounds = array<i64: 1>, scalar_prefetch = 0 : i64, scratch_operands = 0 : i64, tpu.core_type = #tpu.core_type<tc>, window_params = [{transform_indices = @transform_0, window_bounds = array<i64: 3, 2>}, {transform_indices = @transform_1, window_bounds = array<i64: 3>}, {transform_indices = @transform_2, window_bounds = array<i64: 3, 3>}, {transform_indices = @transform_3, window_bounds = array<i64: 3>}, {transform_indices = @transform_4, window_bounds = array<i64: 1, 3>}, {transform_indices = @transform_5, window_bounds = array<i64: 1>}, {transform_indices = @transform_6, window_bounds = array<i64: 1, 2, 8, 512>}, {transform_indices = @transform_7, window_bounds = array<i64: 1, 8, 512>}]} {
    %c0 = arith.constant 0 : index
    %c0_0 = arith.constant 0 : index
    %c0_1 = arith.constant 0 : index
    %c0_2 = arith.constant 0 : index
    %0 = vector.load %arg7[%c0, %c0_0, %c0_1, %c0_2] : memref<1x2x8x512xf32, #tpu.memory_space<vmem>>, vector<1x1x8x512xf32>
    %1 = vector.shape_cast %0 : vector<1x1x8x512xf32> to vector<8x512xf32>
    %c0_3 = arith.constant 0 : index
    %c1 = arith.constant 1 : index
    %c0_4 = arith.constant 0 : index
    %c0_5 = arith.constant 0 : index
    %2 = vector.load %arg7[%c0_3, %c1, %c0_4, %c0_5] : memref<1x2x8x512xf32, #tpu.memory_space<vmem>>, vector<1x1x8x512xf32>
    %3 = vector.shape_cast %2 : vector<1x1x8x512xf32> to vector<8x512xf32>
    %c0_6 = arith.constant 0 : index
    %c0_7 = arith.constant 0 : index
    %4 = memref.load %arg1[%c0_6, %c0_7] : memref<3x2xf32, #tpu.memory_space<smem>>
    %5 = vector.broadcast %4 : f32 to vector<8x512xf32>
    %6 = arith.mulf %1, %5 : vector<8x512xf32>
    %c0_8 = arith.constant 0 : index
    %c1_9 = arith.constant 1 : index
    %7 = memref.load %arg1[%c0_8, %c1_9] : memref<3x2xf32, #tpu.memory_space<smem>>
    %8 = vector.broadcast %7 : f32 to vector<8x512xf32>
    %9 = arith.mulf %3, %8 : vector<8x512xf32>
    %10 = arith.addf %6, %9 : vector<8x512xf32>
    %c0_10 = arith.constant 0 : index
    %11 = memref.load %arg2[%c0_10] : memref<3xf32, #tpu.memory_space<smem>>
    %12 = vector.broadcast %11 : f32 to vector<8x512xf32>
    %13 = arith.addf %10, %12 : vector<8x512xf32>
    %14 = math.tanh %13 : vector<8x512xf32>
    %c1_11 = arith.constant 1 : index
    %c0_12 = arith.constant 0 : index
    %15 = memref.load %arg1[%c1_11, %c0_12] : memref<3x2xf32, #tpu.memory_space<smem>>
    %16 = vector.broadcast %15 : f32 to vector<8x512xf32>
    %17 = arith.mulf %1, %16 : vector<8x512xf32>
    %c1_13 = arith.constant 1 : index
    %c1_14 = arith.constant 1 : index
    %18 = memref.load %arg1[%c1_13, %c1_14] : memref<3x2xf32, #tpu.memory_space<smem>>
    %19 = vector.broadcast %18 : f32 to vector<8x512xf32>
    %20 = arith.mulf %3, %19 : vector<8x512xf32>
    %21 = arith.addf %17, %20 : vector<8x512xf32>
    %c1_15 = arith.constant 1 : index
    %22 = memref.load %arg2[%c1_15] : memref<3xf32, #tpu.memory_space<smem>>
    %23 = vector.broadcast %22 : f32 to vector<8x512xf32>
    %24 = arith.addf %21, %23 : vector<8x512xf32>
    %25 = math.tanh %24 : vector<8x512xf32>
    %c2 = arith.constant 2 : index
    %c0_16 = arith.constant 0 : index
    %26 = memref.load %arg1[%c2, %c0_16] : memref<3x2xf32, #tpu.memory_space<smem>>
    %27 = vector.broadcast %26 : f32 to vector<8x512xf32>
    %28 = arith.mulf %1, %27 : vector<8x512xf32>
    %c2_17 = arith.constant 2 : index
    %c1_18 = arith.constant 1 : index
    %29 = memref.load %arg1[%c2_17, %c1_18] : memref<3x2xf32, #tpu.memory_space<smem>>
    %30 = vector.broadcast %29 : f32 to vector<8x512xf32>
    %31 = arith.mulf %3, %30 : vector<8x512xf32>
    %32 = arith.addf %28, %31 : vector<8x512xf32>
    %c2_19 = arith.constant 2 : index
    %33 = memref.load %arg2[%c2_19] : memref<3xf32, #tpu.memory_space<smem>>
    %34 = vector.broadcast %33 : f32 to vector<8x512xf32>
    %35 = arith.addf %32, %34 : vector<8x512xf32>
    %36 = math.tanh %35 : vector<8x512xf32>
    %c0_20 = arith.constant 0 : index
    %c0_21 = arith.constant 0 : index
    %37 = memref.load %arg3[%c0_20, %c0_21] : memref<3x3xf32, #tpu.memory_space<smem>>
    %38 = vector.broadcast %37 : f32 to vector<8x512xf32>
    %39 = arith.mulf %14, %38 : vector<8x512xf32>
    %c0_22 = arith.constant 0 : index
    %c1_23 = arith.constant 1 : index
    %40 = memref.load %arg3[%c0_22, %c1_23] : memref<3x3xf32, #tpu.memory_space<smem>>
    %41 = vector.broadcast %40 : f32 to vector<8x512xf32>
    %42 = arith.mulf %25, %41 : vector<8x512xf32>
    %43 = arith.addf %39, %42 : vector<8x512xf32>
    %c0_24 = arith.constant 0 : index
    %c2_25 = arith.constant 2 : index
    %44 = memref.load %arg3[%c0_24, %c2_25] : memref<3x3xf32, #tpu.memory_space<smem>>
    %45 = vector.broadcast %44 : f32 to vector<8x512xf32>
    %46 = arith.mulf %36, %45 : vector<8x512xf32>
    %47 = arith.addf %43, %46 : vector<8x512xf32>
    %c0_26 = arith.constant 0 : index
    %48 = memref.load %arg4[%c0_26] : memref<3xf32, #tpu.memory_space<smem>>
    %49 = vector.broadcast %48 : f32 to vector<8x512xf32>
    %50 = arith.addf %47, %49 : vector<8x512xf32>
    %51 = math.tanh %50 : vector<8x512xf32>
    %c1_27 = arith.constant 1 : index
    %c0_28 = arith.constant 0 : index
    %52 = memref.load %arg3[%c1_27, %c0_28] : memref<3x3xf32, #tpu.memory_space<smem>>
    %53 = vector.broadcast %52 : f32 to vector<8x512xf32>
    %54 = arith.mulf %14, %53 : vector<8x512xf32>
    %c1_29 = arith.constant 1 : index
    %c1_30 = arith.constant 1 : index
    %55 = memref.load %arg3[%c1_29, %c1_30] : memref<3x3xf32, #tpu.memory_space<smem>>
    %56 = vector.broadcast %55 : f32 to vector<8x512xf32>
    %57 = arith.mulf %25, %56 : vector<8x512xf32>
    %58 = arith.addf %54, %57 : vector<8x512xf32>
    %c1_31 = arith.constant 1 : index
    %c2_32 = arith.constant 2 : index
    %59 = memref.load %arg3[%c1_31, %c2_32] : memref<3x3xf32, #tpu.memory_space<smem>>
    %60 = vector.broadcast %59 : f32 to vector<8x512xf32>
    %61 = arith.mulf %36, %60 : vector<8x512xf32>
    %62 = arith.addf %58, %61 : vector<8x512xf32>
    %c1_33 = arith.constant 1 : index
    %63 = memref.load %arg4[%c1_33] : memref<3xf32, #tpu.memory_space<smem>>
    %64 = vector.broadcast %63 : f32 to vector<8x512xf32>
    %65 = arith.addf %62, %64 : vector<8x512xf32>
    %66 = math.tanh %65 : vector<8x512xf32>
    %c2_34 = arith.constant 2 : index
    %c0_35 = arith.constant 0 : index
    %67 = memref.load %arg3[%c2_34, %c0_35] : memref<3x3xf32, #tpu.memory_space<smem>>
    %68 = vector.broadcast %67 : f32 to vector<8x512xf32>
    %69 = arith.mulf %14, %68 : vector<8x512xf32>
    %c2_36 = arith.constant 2 : index
    %c1_37 = arith.constant 1 : index
    %70 = memref.load %arg3[%c2_36, %c1_37] : memref<3x3xf32, #tpu.memory_space<smem>>
    %71 = vector.broadcast %70 : f32 to vector<8x512xf32>
    %72 = arith.mulf %25, %71 : vector<8x512xf32>
    %73 = arith.addf %69, %72 : vector<8x512xf32>
    %c2_38 = arith.constant 2 : index
    %c2_39 = arith.constant 2 : index
    %74 = memref.load %arg3[%c2_38, %c2_39] : memref<3x3xf32, #tpu.memory_space<smem>>
    %75 = vector.broadcast %74 : f32 to vector<8x512xf32>
    %76 = arith.mulf %36, %75 : vector<8x512xf32>
    %77 = arith.addf %73, %76 : vector<8x512xf32>
    %c2_40 = arith.constant 2 : index
    %78 = memref.load %arg4[%c2_40] : memref<3xf32, #tpu.memory_space<smem>>
    %79 = vector.broadcast %78 : f32 to vector<8x512xf32>
    %80 = arith.addf %77, %79 : vector<8x512xf32>
    %81 = math.tanh %80 : vector<8x512xf32>
    %c0_41 = arith.constant 0 : index
    %c0_42 = arith.constant 0 : index
    %82 = memref.load %arg5[%c0_41, %c0_42] : memref<1x3xf32, #tpu.memory_space<smem>>
    %83 = vector.broadcast %82 : f32 to vector<8x512xf32>
    %84 = arith.mulf %51, %83 : vector<8x512xf32>
    %c0_43 = arith.constant 0 : index
    %c1_44 = arith.constant 1 : index
    %85 = memref.load %arg5[%c0_43, %c1_44] : memref<1x3xf32, #tpu.memory_space<smem>>
    %86 = vector.broadcast %85 : f32 to vector<8x512xf32>
    %87 = arith.mulf %66, %86 : vector<8x512xf32>
    %88 = arith.addf %84, %87 : vector<8x512xf32>
    %c0_45 = arith.constant 0 : index
    %c2_46 = arith.constant 2 : index
    %89 = memref.load %arg5[%c0_45, %c2_46] : memref<1x3xf32, #tpu.memory_space<smem>>
    %90 = vector.broadcast %89 : f32 to vector<8x512xf32>
    %91 = arith.mulf %81, %90 : vector<8x512xf32>
    %92 = arith.addf %88, %91 : vector<8x512xf32>
    %c0_47 = arith.constant 0 : index
    %93 = memref.load %arg6[%c0_47] : memref<1xf32, #tpu.memory_space<smem>>
    %94 = vector.broadcast %93 : f32 to vector<8x512xf32>
    %95 = arith.addf %92, %94 : vector<8x512xf32>
    %96 = math.tanh %95 : vector<8x512xf32>
    %c0_48 = arith.constant 0 : index
    %c0_49 = arith.constant 0 : index
    %c0_50 = arith.constant 0 : index
    %97 = vector.load %arg8[%c0_48, %c0_49, %c0_50] : memref<1x8x512xf32, #tpu.memory_space<vmem>>, vector<1x8x512xf32>
    %98 = vector.shape_cast %97 : vector<1x8x512xf32> to vector<8x512xf32>
    %99 = vector.shape_cast %96 : vector<8x512xf32> to vector<1x8x512xf32>
    tpu.vector_store %arg8[%c0_48, %c0_49, %c0_50], %99 {strides = array<i32>} : memref<1x8x512xf32, #tpu.memory_space<vmem>>, vector<1x8x512xf32>,
    return
  }
  func.func @transform_0(%arg0: i32) -> (i32, i32) {
    %c0_i32 = arith.constant 0 : i32
    %c0_i32_0 = arith.constant 0 : i32
    %c0_i32_1 = arith.constant 0 : i32
    return %c0_i32, %c0_i32_0 : i32, i32
  }
  func.func @transform_1(%arg0: i32) -> i32 {
    %c0_i32 = arith.constant 0 : i32
    %c0_i32_0 = arith.constant 0 : i32
    return %c0_i32 : i32
  }
  func.func @transform_2(%arg0: i32) -> (i32, i32) {
    %c0_i32 = arith.constant 0 : i32
    %c0_i32_0 = arith.constant 0 : i32
    %c0_i32_1 = arith.constant 0 : i32
    return %c0_i32, %c0_i32_0 : i32, i32
  }
  func.func @transform_3(%arg0: i32) -> i32 {
    %c0_i32 = arith.constant 0 : i32
    %c0_i32_0 = arith.constant 0 : i32
    return %c0_i32 : i32
  }
  func.func @transform_4(%arg0: i32) -> (i32, i32) {
    %c0_i32 = arith.constant 0 : i32
    %c0_i32_0 = arith.constant 0 : i32
    %c0_i32_1 = arith.constant 0 : i32
    return %c0_i32, %c0_i32_0 : i32, i32
  }
  func.func @transform_5(%arg0: i32) -> i32 {
    %c0_i32 = arith.constant 0 : i32
    %c0_i32_0 = arith.constant 0 : i32
    return %c0_i32 : i32
  }
  func.func @transform_6(%arg0: i32) -> (i32, i32, i32, i32) {
    %c0_i32 = arith.constant 0 : i32
    %c0_i32_0 = arith.constant 0 : i32
    %c0_i32_1 = arith.constant 0 : i32
    %c0_i32_2 = arith.constant 0 : i32
    return %arg0, %c0_i32, %c0_i32_0, %c0_i32_1 : i32, i32, i32, i32
  }
  func.func @transform_7(%arg0: i32) -> (i32, i32, i32) {
    %c0_i32 = arith.constant 0 : i32
    %c0_i32_0 = arith.constant 0 : i32
    %c0_i32_1 = arith.constant 0 : i32
    return %arg0, %c0_i32, %c0_i32_0 : i32, i32, i32
  }
}

</mosaic_0001>

<llo_original>
// kernel: tpu_custom_call.1
$region0: #{tpu_custom_call.1}
  #allocation0 [shape = 'u32[]', space=smem, size = 0x4, offset = 0x4, fixed_abs, tag = 'smem constant byte address 0x4 - core index']
  #allocation1 [shape = 'u32[144,128]{1,0:T(1,128)}', space=vmem, size = 0x12000, scoped, tag = 'internal scratch']
  #allocation2 [shape = 'f32[1]{0:T(128)S(6)}', space=smem, size = 0x200, scoped, tag = 'scoped memory for tpu_custom_call.1']
  %s0 = inlined_call_operand.vmem [shape: f32[3,2], index: 0, kind: input, shape index: {}]
  %s1 = inlined_call_operand.vmem [shape: f32[3], index: 1, kind: input, shape index: {}]
  %s2 = inlined_call_operand.vmem [shape: f32[3,3], index: 2, kind: input, shape index: {}]
  %s3 = inlined_call_operand.vmem [shape: f32[3], index: 3, kind: input, shape index: {}]
  %s4 = inlined_call_operand.vmem [shape: f32[1,3], index: 4, kind: input, shape index: {}]
  %s5 = inlined_call_operand.<no memory space> [shape: f32[1], index: 5, kind: input, shape index: {}]
  %s6 = inlined_call_operand.hbm [shape: f32[1,2,8,512], index: 6, kind: input, shape index: {}]
  %s7 = inlined_call_operand.hbm [shape: f32[1,8,512], index: 7, kind: output, shape index: {}]
  %s8 = sld [smem:[#allocation0]]
  $region62: #{tpu_custom_call.1} parent=0
    _
  %s10 = ssub.s32 1, %s8
  %s11 = scalar_select 0, %s10, %s8
  %12 = sst [smem:[#allocation2]] %s5
  $region1: #{tpu_custom_call.1} parent=0
    #allocation3 [shape = 'u8[2048]{0}', space=smem, size = 0x800, scoped, tag = 'input window, operand 0, single buffered']
    #allocation4 [shape = 's32[1]{0}', space=sflag, size = 0x4, scoped, tag = 'scoped memory for tpu_custom_call.1']
    #allocation5 [shape = 's32[1]{0}', space=sflag, size = 0x4, scoped, tag = 'scoped memory for tpu_custom_call.1']
    #allocation6 [shape = 's32[1]{0}', space=sflag, size = 0x4, scoped, tag = 'scoped memory for tpu_custom_call.1']
    #allocation7 [shape = 'u8[512]{0}', space=smem, size = 0x200, scoped, tag = 'input window, operand 1, single buffered']
    #allocation8 [shape = 's32[1]{0}', space=sflag, size = 0x4, scoped, tag = 'scoped memory for tpu_custom_call.1']
    #allocation9 [shape = 'u8[2048]{0}', space=smem, size = 0x800, scoped, tag = 'input window, operand 2, single buffered']
    #allocation10 [shape = 'u8[512]{0}', space=smem, size = 0x200, scoped, tag = 'input window, operand 3, single buffered']
    #allocation11 [shape = 's32[1]{0}', space=sflag, size = 0x4, scoped, tag = 'scoped memory for tpu_custom_call.1']
    #allocation12 [shape = 'u8[512]{0}', space=smem, size = 0x200, scoped, tag = 'input window, operand 4, single buffered']
    #allocation13 [shape = 'u8[32768]{0}', space=vmem, size = 0x8000, scoped, tag = 'input window, operand 6, single buffered']
    #allocation14 [shape = 'u8[16384]{0}', space=vmem, size = 0x4000, scoped, tag = 'output window, operand 0, single buffered']
    %13 = vsyncpa [#allocation6], 0
    %14 = vsyncpa [#allocation8], 0
    %15 = vsyncpa [#allocation11], 0
    %16 = vsyncpa [#allocation4], 0
    %17 = vsyncpa [#allocation5], 0
    // Predicated region
    $region2: #{tpu_custom_call.1} parent=1 // pred_check
      _
    $region3: #{tpu_custom_call.1} parent=1 // pred_check_branch
      %19 = sbr.rel (0) target = $region5
    $region4: #{tpu_custom_call.1} parent=1 // pred_region
      %s21 = ssub.s32 64, 64
      %22 = vsyncadd [#allocation6], %s21
      %s24 = sshll.u32 %s0, 4
      %s25 = int_to_ptr.vmem [resolvable:$true] %s24
      %27 = dma.vmem_to_smem %s25, 64, [#allocation3], [#allocation6]
    $region5: #{tpu_custom_call.1} parent=1 // pred_fallthru
      _
    // Predicated region
    $region6: #{tpu_custom_call.1} parent=1 // pred_check
      _
    $region7: #{tpu_custom_call.1} parent=1 // pred_check_branch
      %29 = sbr.rel (0) target = $region9
    $region8: #{tpu_custom_call.1} parent=1 // pred_region
      %s31 = ssub.s32 16, 16
      %32 = vsyncadd [#allocation8], %s31
      %s34 = sshll.u32 %s1, 4
      %s35 = int_to_ptr.vmem [resolvable:$true] %s34
      %37 = dma.vmem_to_smem %s35, 16, [#allocation7], [#allocation8]
    $region9: #{tpu_custom_call.1} parent=1 // pred_fallthru
      _
    // Predicated region
    $region10: #{tpu_custom_call.1} parent=1 // pred_check
      _
    $region11: #{tpu_custom_call.1} parent=1 // pred_check_branch
      %39 = sbr.rel (0) target = $region13
    $region12: #{tpu_custom_call.1} parent=1 // pred_region
      %s41 = ssub.s32 64, 64
      %42 = vsyncadd [#allocation8], %s41
      %s44 = sshll.u32 %s2, 4
      %s45 = int_to_ptr.vmem [resolvable:$true] %s44
      %47 = dma.vmem_to_smem %s45, 64, [#allocation9], [#allocation8]
    $region13: #{tpu_custom_call.1} parent=1 // pred_fallthru
      _
    // Predicated region
    $region14: #{tpu_custom_call.1} parent=1 // pred_check
      _
    $region15: #{tpu_custom_call.1} parent=1 // pred_check_branch
      %49 = sbr.rel (0) target = $region17
    $region16: #{tpu_custom_call.1} parent=1 // pred_region
      %s51 = ssub.s32 16, 16
      %52 = vsyncadd [#allocation11], %s51
      %s54 = sshll.u32 %s3, 4
      %s55 = int_to_ptr.vmem [resolvable:$true] %s54
      %57 = dma.vmem_to_smem %s55, 16, [#allocation10], [#allocation11]
    $region17: #{tpu_custom_call.1} parent=1 // pred_fallthru
      _
    // Predicated region
    $region18: #{tpu_custom_call.1} parent=1 // pred_check
      _
    $region19: #{tpu_custom_call.1} parent=1 // pred_check_branch
      %59 = sbr.rel (0) target = $region21
    $region20: #{tpu_custom_call.1} parent=1 // pred_region
      %s61 = ssub.s32 16, 16
      %62 = vsyncadd [#allocation11], %s61
      %s64 = sshll.u32 %s4, 4
      %s65 = int_to_ptr.vmem [resolvable:$true] %s64
      %67 = dma.vmem_to_smem %s65, 16, [#allocation12], [#allocation11]
    $region21: #{tpu_custom_call.1} parent=1 // pred_fallthru
      _
    // Predicated region
    $region22: #{tpu_custom_call.1} parent=1 // pred_check
      _
    $region23: #{tpu_custom_call.1} parent=1 // pred_check_branch
      %69 = sbr.rel (0) target = $region25
    $region24: #{tpu_custom_call.1} parent=1 // pred_region
      _
    $region25: #{tpu_custom_call.1} parent=1 // pred_fallthru
      _
    // Predicated region
    $region26: #{tpu_custom_call.1} parent=1 // pred_check
      _
    $region27: #{tpu_custom_call.1} parent=1 // pred_check_branch
      %71 = sbr.rel (0) target = $region29
    $region28: #{tpu_custom_call.1} parent=1 // pred_region
      %s73 = ssub.s32 1024, 1024
      %74 = vsyncadd [#allocation4], %s73
      %s75 = sshll.u32 [#allocation13], 4
      %s76 = int_to_ptr.vmem [resolvable:$true] %s75
      %81 = dma.hbm_to_vmem [thread:$0]  %s6, 1024, %s76, [#allocation4], 512, 512, 32
    $region29: #{tpu_custom_call.1} parent=1 // pred_fallthru
      _
    // Predicated region
    $region30: #{tpu_custom_call.1} parent=1 // pred_check
      _
    $region31: #{tpu_custom_call.1} parent=1 // pred_check_branch
      %83 = sbr.rel (0) target = $region33
    $region32: #{tpu_custom_call.1} parent=1 // pred_region
      %84 = dma.done [#allocation6], 64
    $region33: #{tpu_custom_call.1} parent=1 // pred_fallthru
      _
    // Predicated region
    $region34: #{tpu_custom_call.1} parent=1 // pred_check
      _
    $region35: #{tpu_custom_call.1} parent=1 // pred_check_branch
      %86 = sbr.rel (0) target = $region37
    $region36: #{tpu_custom_call.1} parent=1 // pred_region
      %87 = dma.done [#allocation8], 16
    $region37: #{tpu_custom_call.1} parent=1 // pred_fallthru
      _
    // Predicated region
    $region38: #{tpu_custom_call.1} parent=1 // pred_check
      _
    $region39: #{tpu_custom_call.1} parent=1 // pred_check_branch
      %89 = sbr.rel (0) target = $region41
    $region40: #{tpu_custom_call.1} parent=1 // pred_region
      %90 = dma.done [#allocation8], 64
    $region41: #{tpu_custom_call.1} parent=1 // pred_fallthru
      _
    // Predicated region
    $region42: #{tpu_custom_call.1} parent=1 // pred_check
      _
    $region43: #{tpu_custom_call.1} parent=1 // pred_check_branch
      %92 = sbr.rel (0) target = $region45
    $region44: #{tpu_custom_call.1} parent=1 // pred_region
      %93 = dma.done [#allocation11], 16
    $region45: #{tpu_custom_call.1} parent=1 // pred_fallthru
      _
    // Predicated region
    $region46: #{tpu_custom_call.1} parent=1 // pred_check
      _
    $region47: #{tpu_custom_call.1} parent=1 // pred_check_branch
      %95 = sbr.rel (0) target = $region49
    $region48: #{tpu_custom_call.1} parent=1 // pred_region
      %96 = dma.done [#allocation11], 16
    $region49: #{tpu_custom_call.1} parent=1 // pred_fallthru
      _
    // Predicated region
    $region50: #{tpu_custom_call.1} parent=1 // pred_check
      _
    $region51: #{tpu_custom_call.1} parent=1 // pred_check_branch
      %98 = sbr.rel (0) target = $region53
    $region52: #{tpu_custom_call.1} parent=1 // pred_region
      %99 = dma.done [#allocation4], 1024
    $region53: #{tpu_custom_call.1} parent=1 // pred_fallthru
      _
    %100 = sfence
    %v101 = vld [vmem:[#allocation13] sm:$0xff]
    %v102 = vld [vmem:[#allocation13 + $0x8] sm:$0xff]
    %v103 = vld [vmem:[#allocation13 + $0x10] sm:$0xff]
    %v104 = vld [vmem:[#allocation13 + $0x18] sm:$0xff]
    %s105 = scalar_lea.vmem [#allocation13], 32
    %v106 = vld [vmem:[%s105] sm:$0xff]
    %v107 = vld [vmem:[%s105 + $0x8] sm:$0xff]
    %v108 = vld [vmem:[%s105 + $0x10] sm:$0xff]
    %v109 = vld [vmem:[%s105 + $0x18] sm:$0xff]
    %s110 = sld [smem:[#allocation3]]
    %v111 = vstv %s110
    %v112 = vmul.f32 %v101, %v111
    %v113 = vmul.f32 %v102, %v111
    %v114 = vmul.f32 %v103, %v111
    %v115 = vmul.f32 %v104, %v111
    %s116 = sld [smem:[#allocation3 + $0x1]]
    %v117 = vstv %s116
    %v118 = vmul.f32 %v106, %v117
    %v119 = vmul.f32 %v107, %v117
    %v120 = vmul.f32 %v108, %v117
    %v121 = vmul.f32 %v109, %v117
    %v122 = vadd.f32 %v112, %v118
    %v123 = vadd.f32 %v113, %v119
    %v124 = vadd.f32 %v114, %v120
    %v125 = vadd.f32 %v115, %v121
    %s126 = sld [smem:[#allocation7]]
    %v127 = vstv %s126
    %v128 = vadd.f32 %v122, %v127
    %v129 = vadd.f32 %v123, %v127
    %v130 = vadd.f32 %v124, %v127
    %v131 = vadd.f32 %v125, %v127
    %v132 = vtanh.pop %v128
    %v133 = vtanh.pop %v129
    %v134 = vtanh.pop %v130
    %v135 = vtanh.pop %v131
    %s136 = sld [smem:[#allocation3 + $0x80]]
    %v137 = vstv %s136
    %v138 = vmul.f32 %v101, %v137
    %v139 = vmul.f32 %v102, %v137
    %v140 = vmul.f32 %v103, %v137
    %v141 = vmul.f32 %v104, %v137
    %s142 = sld [smem:[#allocation3 + $0x81]]
    %v143 = vstv %s142
    %v144 = vmul.f32 %v106, %v143
    %v145 = vmul.f32 %v107, %v143
    %v146 = vmul.f32 %v108, %v143
    %v147 = vmul.f32 %v109, %v143
    %v148 = vadd.f32 %v138, %v144
    %v149 = vadd.f32 %v139, %v145
    %v150 = vadd.f32 %v140, %v146
    %v151 = vadd.f32 %v141, %v147
    %s152 = sld [smem:[#allocation7 + $0x1]]
    %v153 = vstv %s152
    %v154 = vadd.f32 %v148, %v153
    %v155 = vadd.f32 %v149, %v153
    %v156 = vadd.f32 %v150, %v153
    %v157 = vadd.f32 %v151, %v153
    %v158 = vtanh.pop %v154
    %v159 = vtanh.pop %v155
    %v160 = vtanh.pop %v156
    %v161 = vtanh.pop %v157
    %s162 = sld [smem:[#allocation3 + $0x100]]
    %v163 = vstv %s162
    %v164 = vmul.f32 %v101, %v163
    %v165 = vmul.f32 %v102, %v163
    %v166 = vmul.f32 %v103, %v163
    %v167 = vmul.f32 %v104, %v163
    %s168 = sld [smem:[#allocation3 + $0x101]]
    %v169 = vstv %s168
    %v170 = vmul.f32 %v106, %v169
    %v171 = vmul.f32 %v107, %v169
    %v172 = vmul.f32 %v108, %v169
    %v173 = vmul.f32 %v109, %v169
    %v174 = vadd.f32 %v164, %v170
    %v175 = vadd.f32 %v165, %v171
    %v176 = vadd.f32 %v166, %v172
    %v177 = vadd.f32 %v167, %v173
    %s178 = sld [smem:[#allocation7 + $0x2]]
    %v179 = vstv %s178
    %v180 = vadd.f32 %v174, %v179
    %v181 = vadd.f32 %v175, %v179
    %v182 = vadd.f32 %v176, %v179
    %v183 = vadd.f32 %v177, %v179
    %v184 = vtanh.pop %v180
    %v185 = vtanh.pop %v181
    %v186 = vtanh.pop %v182
    %v187 = vtanh.pop %v183
    %s188 = sld [smem:[#allocation9]]
    %v189 = vstv %s188
    %v190 = vmul.f32 %v132, %v189
    %v191 = vmul.f32 %v133, %v189
    %v192 = vmul.f32 %v134, %v189
    %v193 = vmul.f32 %v135, %v189
    %s194 = sld [smem:[#allocation9 + $0x1]]
    %v195 = vstv %s194
    %v196 = vmul.f32 %v158, %v195
    %v197 = vmul.f32 %v159, %v195
    %v198 = vmul.f32 %v160, %v195
    %v199 = vmul.f32 %v161, %v195
    %v200 = vadd.f32 %v190, %v196
    %v201 = vadd.f32 %v191, %v197
    %v202 = vadd.f32 %v192, %v198
    %v203 = vadd.f32 %v193, %v199
    %s204 = sld [smem:[#allocation9 + $0x2]]
    %v205 = vstv %s204
    %v206 = vmul.f32 %v184, %v205
    %v207 = vmul.f32 %v185, %v205
    %v208 = vmul.f32 %v186, %v205
    %v209 = vmul.f32 %v187, %v205
    %v210 = vadd.f32 %v200, %v206
    %v211 = vadd.f32 %v201, %v207
    %v212 = vadd.f32 %v202, %v208
    %v213 = vadd.f32 %v203, %v209
    %s214 = sld [smem:[#allocation10]]
    %v215 = vstv %s214
    %v216 = vadd.f32 %v210, %v215
    %v217 = vadd.f32 %v211, %v215
    %v218 = vadd.f32 %v212, %v215
    %v219 = vadd.f32 %v213, %v215
    %v220 = vtanh.pop %v216
    %v221 = vtanh.pop %v217
    %v222 = vtanh.pop %v218
    %v223 = vtanh.pop %v219
    %s224 = sld [smem:[#allocation9 + $0x80]]
    %v225 = vstv %s224
    %v226 = vmul.f32 %v132, %v225
    %v227 = vmul.f32 %v133, %v225
    %v228 = vmul.f32 %v134, %v225
    %v229 = vmul.f32 %v135, %v225
    %s230 = sld [smem:[#allocation9 + $0x81]]
    %v231 = vstv %s230
    %v232 = vmul.f32 %v158, %v231
    %v233 = vmul.f32 %v159, %v231
    %v234 = vmul.f32 %v160, %v231
    %v235 = vmul.f32 %v161, %v231
    %v236 = vadd.f32 %v226, %v232
    %v237 = vadd.f32 %v227, %v233
    %v238 = vadd.f32 %v228, %v234
    %v239 = vadd.f32 %v229, %v235
    %s240 = sld [smem:[#allocation9 + $0x82]]
    %v241 = vstv %s240
    %v242 = vmul.f32 %v184, %v241
    %v243 = vmul.f32 %v185, %v241
    %v244 = vmul.f32 %v186, %v241
    %v245 = vmul.f32 %v187, %v241
    %v246 = vadd.f32 %v236, %v242
    %v247 = vadd.f32 %v237, %v243
    %v248 = vadd.f32 %v238, %v244
    %v249 = vadd.f32 %v239, %v245
    %s250 = sld [smem:[#allocation10 + $0x1]]
    %v251 = vstv %s250
    %v252 = vadd.f32 %v246, %v251
    %v253 = vadd.f32 %v247, %v251
    %v254 = vadd.f32 %v248, %v251
    %v255 = vadd.f32 %v249, %v251
    %v256 = vtanh.pop %v252
    %v257 = vtanh.pop %v253
    %v258 = vtanh.pop %v254
    %v259 = vtanh.pop %v255
    %s260 = sld [smem:[#allocation9 + $0x100]]
    %v261 = vstv %s260
    %v262 = vmul.f32 %v132, %v261
    %v263 = vmul.f32 %v133, %v261
    %v264 = vmul.f32 %v134, %v261
    %v265 = vmul.f32 %v135, %v261
    %s266 = sld [smem:[#allocation9 + $0x101]]
    %v267 = vstv %s266
    %v268 = vmul.f32 %v158, %v267
    %v269 = vmul.f32 %v159, %v267
    %v270 = vmul.f32 %v160, %v267
    %v271 = vmul.f32 %v161, %v267
    %v272 = vadd.f32 %v262, %v268
    %v273 = vadd.f32 %v263, %v269
    %v274 = vadd.f32 %v264, %v270
    %v275 = vadd.f32 %v265, %v271
    %s276 = sld [smem:[#allocation9 + $0x102]]
    %v277 = vstv %s276
    %v278 = vmul.f32 %v184, %v277
    %v279 = vmul.f32 %v185, %v277
    %v280 = vmul.f32 %v186, %v277
    %v281 = vmul.f32 %v187, %v277
    %v282 = vadd.f32 %v272, %v278
    %v283 = vadd.f32 %v273, %v279
    %v284 = vadd.f32 %v274, %v280
    %v285 = vadd.f32 %v275, %v281
    %s286 = sld [smem:[#allocation10 + $0x2]]
    %v287 = vstv %s286
    %v288 = vadd.f32 %v282, %v287
    %v289 = vadd.f32 %v283, %v287
    %v290 = vadd.f32 %v284, %v287
    %v291 = vadd.f32 %v285, %v287
    %v292 = vtanh.pop %v288
    %v293 = vtanh.pop %v289
    %v294 = vtanh.pop %v290
    %v295 = vtanh.pop %v291
    %s296 = sld [smem:[#allocation12]]
    %v297 = vstv %s296
    %v298 = vmul.f32 %v220, %v297
    %v299 = vmul.f32 %v221, %v297
    %v300 = vmul.f32 %v222, %v297
    %v301 = vmul.f32 %v223, %v297
    %s302 = sld [smem:[#allocation12 + $0x1]]
    %v303 = vstv %s302
    %v304 = vmul.f32 %v256, %v303
    %v305 = vmul.f32 %v257, %v303
    %v306 = vmul.f32 %v258, %v303
    %v307 = vmul.f32 %v259, %v303
    %v308 = vadd.f32 %v298, %v304
    %v309 = vadd.f32 %v299, %v305
    %v310 = vadd.f32 %v300, %v306
    %v311 = vadd.f32 %v301, %v307
    %s312 = sld [smem:[#allocation12 + $0x2]]
    %v313 = vstv %s312
    %v314 = vmul.f32 %v292, %v313
    %v315 = vmul.f32 %v293, %v313
    %v316 = vmul.f32 %v294, %v313
    %v317 = vmul.f32 %v295, %v313
    %v318 = vadd.f32 %v308, %v314
    %v319 = vadd.f32 %v309, %v315
    %v320 = vadd.f32 %v310, %v316
    %v321 = vadd.f32 %v311, %v317
    %s322 = sld [smem:[#allocation2]]
    %v323 = vstv %s322
    %v324 = vadd.f32 %v318, %v323
    %v325 = vadd.f32 %v319, %v323
    %v326 = vadd.f32 %v320, %v323
    %v327 = vadd.f32 %v321, %v323
    %v328 = vtanh.pop %v324
    %v329 = vtanh.pop %v325
    %v330 = vtanh.pop %v326
    %v331 = vtanh.pop %v327
    %332 = vst [vmem:[#allocation14] sm:$0xff] %v328
    %333 = vst [vmem:[#allocation14 + $0x8] sm:$0xff] %v329
    %334 = vst [vmem:[#allocation14 + $0x10] sm:$0xff] %v330
    %335 = vst [vmem:[#allocation14 + $0x18] sm:$0xff] %v331
    // Predicated region
    $region54: #{tpu_custom_call.1} parent=1 // pred_check
      _
    $region55: #{tpu_custom_call.1} parent=1 // pred_check_branch
      %337 = sbr.rel (0) target = $region57
    $region56: #{tpu_custom_call.1} parent=1 // pred_region
      %s339 = ssub.s32 512, 512
      %340 = vsyncadd [#allocation5], %s339
      %s342 = sshll.u32 [#allocation14], 4
      %s343 = int_to_ptr.vmem [resolvable:$true] %s342
      %345 = dma.vmem_to_hbm [thread:$0]  %s343, 512, %s7, [#allocation5]
    $region57: #{tpu_custom_call.1} parent=1 // pred_fallthru
      _
    // Predicated region
    $region58: #{tpu_custom_call.1} parent=1 // pred_check
      _
    $region59: #{tpu_custom_call.1} parent=1 // pred_check_branch
      %347 = sbr.rel (0) target = $region61
    $region60: #{tpu_custom_call.1} parent=1 // pred_region
      %348 = dma.done [#allocation5], 512
    $region61: #{tpu_custom_call.1} parent=1 // pred_fallthru
      _
    %349 = vsyncpa [#allocation4], 1
    %350 = vsyncpa [#allocation5], 1
    %351 = vsyncpa [#allocation6], 1
    %352 = vsyncpa [#allocation8], 1
    %353 = vsyncpa [#allocation11], 1

</llo_original>
